<compile_context>
chip_gen: v7x
topology: tpu7x:2x2x1
jax: 0.10.0
libtpu: 0.0.40
codegen_flags: <defaults>
</compile_context>

<pallas_src>
import math
from functools import partial

import jax
import jax.numpy as jnp
from jax.experimental import pallas as pl
from jax.experimental.pallas import tpu as pltpu

_LANE = 128


def _vae_latent_kernel(x_ref, w_ref, b_ref, eps_ref, out_ref, *, Lp):
    x = x_ref[...]                                                     # (tb, D) f32

    # Fused heads: one MXU matmul -> (tb, 2*Lp) = [mu_pre | logvar_pre]
    h = jnp.dot(x, w_ref[...], preferred_element_type=jnp.float32) + b_ref[...]
    mu = h[:, :Lp]
    pre = h[:, Lp:]

    # softplus (PyTorch threshold=20) + reparameterize, sharing one exp:
    #   e      = exp(min(pre, 20))
    #   logvar = pre                 if pre > 20 else log1p(e)
    #   std    = exp(0.5 * logvar) = exp(0.5*pre) if pre > 20 else sqrt(1 + e)
    big = pre > 20.0
    e = jnp.exp(jnp.minimum(pre, 20.0))
    logvar = jnp.where(big, pre, jnp.log1p(e))
    std = jnp.where(big, jnp.exp(0.5 * pre), jnp.sqrt(1.0 + e))
    z = eps_ref[...] * std + mu

    # Lane-aligned slice stores into the (tb, 3*Lp) output slab: [ z | mu | logvar ].
    # Each slice starts/ends on a 128-lane boundary -> full-width unmasked vst.
    out_ref[:, 0 * Lp:1 * Lp] = z
    out_ref[:, 1 * Lp:2 * Lp] = mu
    out_ref[:, 2 * Lp:3 * Lp] = logvar


def prepare_params(w_mu, b_mu, w_lv, b_lv):
    """One-time parameter preprocessing (hoisted out of the per-call path).

    w_*: (L, D) PyTorch Linear layout; b_*: (L,).
    Returns fused, transposed, f32, lane-padded weights: (D, 2*Lp) and (1, 2*Lp).
    """
    L, _D = w_mu.shape
    Lp = ((L + _LANE - 1) // _LANE) * _LANE

    def wt(w):  # (L, D) -> (D, Lp)
        return jnp.pad(w.T.astype(jnp.float32), ((0, 0), (0, Lp - L)))

    def bt(b):  # (L,) -> (1, Lp)
        return jnp.pad(b.astype(jnp.float32), (0, Lp - L)).reshape(1, Lp)

    w_cat = jnp.concatenate([wt(w_mu), wt(w_lv)], axis=1)              # (D, 2*Lp)
    b_cat = jnp.concatenate([bt(b_mu), bt(b_lv)], axis=1)              # (1, 2*Lp)
    return w_cat, b_cat, int(L), int(Lp)


def _pick_tb(B):
    """Batch tile: aim for 64-128 rows and a grid of >= 2 steps (pipelining and v7x
    dual-TensorCore sharding). Tiny batches get a single full block -- at B < 16 the
    kernel is pure weight-DMA latency and grid tuning buys nothing."""
    if B < 16:
        return B
    cap = min(128, B // 2)
    for tb in (128, 64, 32, 16, 8):
        if tb <= cap and B % tb == 0:
            return tb
    return B  # batch not tileable by 8: single full block


@partial(jax.jit, static_argnames=("L", "Lp"))
def vae_latent_forward(x_nchw, w_cat, b_cat, eps, *, L, Lp):
    """x_nchw: (B, C, H, W); w_cat: (D, 2*Lp); b_cat: (1, 2*Lp); eps: (B, L)."""
    B = x_nchw.shape[0]
    D = math.prod(x_nchw.shape[1:])                                    # static python int

    x2d = x_nchw.reshape(B, D).astype(jnp.float32)                     # == torch.flatten(x, 1)
    eps_p = jnp.pad(eps.astype(jnp.float32), ((0, 0), (0, Lp - L)))    # (B, Lp)

    tb = _pick_tb(B)
    grid = (B // tb,)

    # VMEM budget: double-buffered x/eps/out tiles + single-buffered fused weights.
    # Keeps v5e (16 MiB default scoped VMEM) from forcing tiny blocks; capped at 64 MiB
    # so it never exceeds v7x physical VMEM.
    est_bytes = 4 * (2 * tb * D + D * 2 * Lp + 2 * Lp + 2 * tb * Lp + 2 * tb * 3 * Lp)
    vmem_limit = int(min(64 << 20, max(32 << 20, 2 * est_bytes)))

    # TODO(synk): with f32 weights the (D, 2*Lp) block costs ~1 KiB per row of D; on v7x
    # (64 MiB physical) this needs a K grid axis + f32 accumulator (axis marked
    # "arbitrary") around D ~ 12-16K, roughly half the D v6e/v5e tolerate. Unnecessary
    # at these shapes.
    out = pl.pallas_call(
        partial(_vae_latent_kernel, Lp=Lp),
        out_shape=jax.ShapeDtypeStruct((B, 3 * Lp), jnp.float32),
        grid_spec=pltpu.PrefetchScalarGridSpec(
            num_scalar_prefetch=0,
            grid=grid,
            in_specs=[
                pl.BlockSpec((tb, D), lambda i: (i, 0)),               # x tile
                pl.BlockSpec((D, 2 * Lp), lambda i: (0, 0),            # fused weights,
                             pipeline_mode=pl.Buffered(1)),            #   grid-invariant
                pl.BlockSpec((1, 2 * Lp), lambda i: (0, 0),            # fused bias,
                             pipeline_mode=pl.Buffered(1)),            #   grid-invariant
                pl.BlockSpec((tb, Lp), lambda i: (i, 0)),              # eps tile
            ],
            out_specs=pl.BlockSpec((tb, 3 * Lp), lambda i: (i, 0)),    # [z|mu|logvar] slab
        ),
        compiler_params=pltpu.CompilerParams(
            dimension_semantics=("parallel",),                          # v7x: shard B across TCs
            vmem_limit_bytes=vmem_limit,
        ),
    )(x2d, w_cat, b_cat, eps_p)

    z = out[:, 0 * Lp:0 * Lp + L]
    mu = out[:, 1 * Lp:1 * Lp + L]
    logvar = out[:, 2 * Lp:2 * Lp + L]
    return z, mu, logvar


if __name__ == "__main__":
    # Small shapes consistent with the module: NCHW input flattened to D = C*H*W.
    B, C, H, W = 2, 4, 16, 16
    D = C * H * W            # input_size = 1024
    L = 32                   # latent_size

    key = jax.random.PRNGKey(0)
    k_x, k_wmu, k_bmu, k_wlv, k_blv, k_eps = jax.random.split(key, 6)

    x = jax.random.normal(k_x, (B, C, H, W), dtype=jnp.float32)

    # Deterministic parameter init (nn.Linear-like uniform(-1/sqrt(D), 1/sqrt(D))).
    bound = 1.0 / (D ** 0.5)
    w_mu = jax.random.uniform(k_wmu, (L, D), minval=-bound, maxval=bound, dtype=jnp.float32)
    b_mu = jax.random.uniform(k_bmu, (L,),   minval=-bound, maxval=bound, dtype=jnp.float32)
    w_lv = jax.random.uniform(k_wlv, (L, D), minval=-bound, maxval=bound, dtype=jnp.float32)
    b_lv = jax.random.uniform(k_blv, (L,),   minval=-bound, maxval=bound, dtype=jnp.float32)

    # eps = torch.randn_like(std) equivalent, generated deterministically in the wrapper.
    eps = jax.random.normal(k_eps, (B, L), dtype=jnp.float32)

    # One-time parameter prep (transpose + cast + pad + fuse), outside the call path.
    w_cat, b_cat, L_, Lp = prepare_params(w_mu, b_mu, w_lv, b_lv)

    z, mu, logvar = vae_latent_forward(x, w_cat, b_cat, eps, L=L_, Lp=Lp)
    jax.block_until_ready((z, mu, logvar))

    # Cross-check against plain-JAX reference.
    x2d = x.reshape(B, D)
    mu_ref = x2d @ w_mu.T + b_mu
    lv_ref = jax.nn.softplus(x2d @ w_lv.T + b_lv)
    z_ref = eps * jnp.exp(0.5 * lv_ref) + mu_ref
    assert jnp.allclose(mu, mu_ref, atol=1e-4, rtol=1e-4)
    assert jnp.allclose(logvar, lv_ref, atol=1e-4, rtol=1e-4)
    assert jnp.allclose(z, z_ref, atol=1e-4, rtol=1e-4)

    print("KERNEL_OK")
</pallas_src>

<mosaic_0001>
module attributes {stable_mosaic.version = 11 : i64} {
  func.func @_vae_latent_kernel(%arg0: i32, %arg1: memref<2x1024xf32, #tpu.memory_space<vmem>>, %arg2: memref<1024x256xf32, #tpu.memory_space<vmem>>, %arg3: memref<1x256xf32, #tpu.memory_space<vmem>>, %arg4: memref<2x128xf32, #tpu.memory_space<vmem>>, %arg5: memref<2x384xf32, #tpu.memory_space<vmem>>) attributes {dimension_semantics = [#tpu.dimension_semantics<parallel>], iteration_bounds = array<i64: 1>, scalar_prefetch = 0 : i64, scratch_operands = 0 : i64, tpu.core_type = #tpu.core_type<tc>, window_params = [{transform_indices = @transform_0, window_bounds = array<i64: 2, 1024>}, {pipeline_mode = #tpu.pipeline_mode<synchronous>, transform_indices = @transform_1, window_bounds = array<i64: 1024, 256>}, {pipeline_mode = #tpu.pipeline_mode<synchronous>, transform_indices = @transform_2, window_bounds = array<i64: 1, 256>}, {transform_indices = @transform_3, window_bounds = array<i64: 2, 128>}, {transform_indices = @transform_4, window_bounds = array<i64: 2, 384>}]} {
    %c0 = arith.constant 0 : index
    %c0_0 = arith.constant 0 : index
    %0 = vector.load %arg1[%c0, %c0_0] : memref<2x1024xf32, #tpu.memory_space<vmem>>, vector<2x1024xf32>
    %c0_1 = arith.constant 0 : index
    %c0_2 = arith.constant 0 : index
    %1 = vector.load %arg2[%c0_1, %c0_2] : memref<1024x256xf32, #tpu.memory_space<vmem>>, vector<1024x256xf32>
    %cst = arith.constant dense<0.000000e+00> : vector<2x256xf32>
    %2 = tpu.matmul %0, %1, %cst {dimension_numbers = #tpu.dot_dimension_numbers<[1], [0], [0], [1], [0, 0, 1, 1], [], []>} : vector<2x1024xf32>, vector<1024x256xf32>, vector<2x256xf32> -> vector<2x256xf32>
    %c0_3 = arith.constant 0 : index
    %c0_4 = arith.constant 0 : index
    %3 = vector.load %arg3[%c0_3, %c0_4] : memref<1x256xf32, #tpu.memory_space<vmem>>, vector<1x256xf32>
    %4 = vector.broadcast %3 : vector<1x256xf32> to vector<2x256xf32>
    %5 = arith.addf %2, %4 : vector<2x256xf32>
    %6 = vector.extract_strided_slice %5 {offsets = [0, 0], sizes = [2, 128], strides = [1, 1]} : vector<2x256xf32> to vector<2x128xf32>
    %7 = vector.extract_strided_slice %5 {offsets = [0, 128], sizes = [2, 128], strides = [1, 1]} : vector<2x256xf32> to vector<2x128xf32>
    %cst_5 = arith.constant 2.000000e+01 : f32
    %8 = vector.broadcast %cst_5 : f32 to vector<2x128xf32>
    %9 = arith.cmpf ogt, %7, %8 : vector<2x128xf32>
    %cst_6 = arith.constant 2.000000e+01 : f32
    %10 = vector.broadcast %cst_6 : f32 to vector<2x128xf32>
    %11 = arith.minimumf %7, %10 : vector<2x128xf32>
    %12 = math.exp %11 : vector<2x128xf32>
    %13 = math.log1p %12 : vector<2x128xf32>
    %14 = arith.select %9, %7, %13 : vector<2x128xi1>, vector<2x128xf32>
    %cst_7 = arith.constant 5.000000e-01 : f32
    %15 = vector.broadcast %cst_7 : f32 to vector<2x128xf32>
    %16 = arith.mulf %15, %7 : vector<2x128xf32>
    %17 = math.exp %16 : vector<2x128xf32>
    %cst_8 = arith.constant 1.000000e+00 : f32
    %18 = vector.broadcast %cst_8 : f32 to vector<2x128xf32>
    %19 = arith.addf %18, %12 : vector<2x128xf32>
    %20 = math.sqrt %19 : vector<2x128xf32>
    %21 = arith.select %9, %17, %20 : vector<2x128xi1>, vector<2x128xf32>
    %c0_9 = arith.constant 0 : index
    %c0_10 = arith.constant 0 : index
    %22 = vector.load %arg4[%c0_9, %c0_10] : memref<2x128xf32, #tpu.memory_space<vmem>>, vector<2x128xf32>
    %23 = arith.mulf %22, %21 : vector<2x128xf32>
    %24 = arith.addf %23, %6 : vector<2x128xf32>
    %c0_11 = arith.constant 0 : index
    %c0_12 = arith.constant 0 : index
    %25 = vector.load %arg5[%c0_11, %c0_12] : memref<2x384xf32, #tpu.memory_space<vmem>>, vector<2x128xf32>
    tpu.vector_store %arg5[%c0_11, %c0_12], %24 {strides = array<i32>} : memref<2x384xf32, #tpu.memory_space<vmem>>, vector<2x128xf32>,
    %c0_13 = arith.constant 0 : index
    %c128 = arith.constant 128 : index
    %26 = vector.load %arg5[%c0_13, %c128] : memref<2x384xf32, #tpu.memory_space<vmem>>, vector<2x128xf32>
    tpu.vector_store %arg5[%c0_13, %c128], %6 {strides = array<i32>} : memref<2x384xf32, #tpu.memory_space<vmem>>, vector<2x128xf32>,
    %c0_14 = arith.constant 0 : index
    %c256 = arith.constant 256 : index
    %27 = vector.load %arg5[%c0_14, %c256] : memref<2x384xf32, #tpu.memory_space<vmem>>, vector<2x128xf32>
    tpu.vector_store %arg5[%c0_14, %c256], %14 {strides = array<i32>} : memref<2x384xf32, #tpu.memory_space<vmem>>, vector<2x128xf32>,
    return
  }
  func.func @transform_0(%arg0: i32) -> (i32, i32) {
    %c0_i32 = arith.constant 0 : i32
    %c0_i32_0 = arith.constant 0 : i32
    return %arg0, %c0_i32 : i32, i32
  }
  func.func @transform_1(%arg0: i32) -> (i32, i32) {
    %c0_i32 = arith.constant 0 : i32
    %c0_i32_0 = arith.constant 0 : i32
    %c0_i32_1 = arith.constant 0 : i32
    return %c0_i32, %c0_i32_0 : i32, i32
  }
  func.func @transform_2(%arg0: i32) -> (i32, i32) {
    %c0_i32 = arith.constant 0 : i32
    %c0_i32_0 = arith.constant 0 : i32
    %c0_i32_1 = arith.constant 0 : i32
    return %c0_i32, %c0_i32_0 : i32, i32
  }
  func.func @transform_3(%arg0: i32) -> (i32, i32) {
    %c0_i32 = arith.constant 0 : i32
    %c0_i32_0 = arith.constant 0 : i32
    return %arg0, %c0_i32 : i32, i32
  }
  func.func @transform_4(%arg0: i32) -> (i32, i32) {
    %c0_i32 = arith.constant 0 : i32
    %c0_i32_0 = arith.constant 0 : i32
    return %arg0, %c0_i32 : i32, i32
  }
}

</mosaic_0001>

<llo_original>
// kernel: vae_latent_forward.1
$region0: #{vae_latent_forward.1}
  #allocation0 [shape = 'u32[]', space=smem, size = 0x4, offset = 0x4, fixed_abs, tag = 'smem constant byte address 0x4 - core index']
  #allocation1 [shape = 'u32[144,128]{1,0:T(1,128)}', space=vmem, size = 0x12000, scoped, tag = 'internal scratch']
  %s0 = inlined_call_operand.vmem [shape: f32[2,1024], index: 0, kind: input, shape index: {}]
  %s1 = inlined_call_operand.hbm [shape: f32[1024,256], index: 1, kind: input, shape index: {}]
  %s2 = inlined_call_operand.vmem [shape: f32[1,256], index: 2, kind: input, shape index: {}]
  %s3 = inlined_call_operand.vmem [shape: f32[2,128], index: 3, kind: input, shape index: {}]
  %s4 = inlined_call_operand.vmem [shape: f32[2,384], index: 4, kind: output, shape index: {}]
  %s5 = sld [smem:[#allocation0]]
  $region30: #{vae_latent_forward.1} parent=0
    _
  %s7 = ssub.s32 1, %s5
  %s8 = scalar_select 0, %s7, %s5
  $region1: #{vae_latent_forward.1} parent=0
    #allocation2 [shape = 'u8[1048576]{0}', space=vmem, size = 0x100000, scoped, tag = 'input window, operand 1, single buffered']
    #allocation3 [shape = 's32[1]{0}', space=sflag, size = 0x4, scoped, tag = 'scoped memory for vae_latent_forward.1']
    %9 = vsyncpa [#allocation3], 0
    // Predicated region
    $region2: #{vae_latent_forward.1} parent=1 // pred_check
      _
    $region3: #{vae_latent_forward.1} parent=1 // pred_check_branch
      %11 = sbr.rel (0) target = $region5
    $region4: #{vae_latent_forward.1} parent=1 // pred_region
      _
    $region5: #{vae_latent_forward.1} parent=1 // pred_fallthru
      _
    // Predicated region
    $region6: #{vae_latent_forward.1} parent=1 // pred_check
      _
    $region7: #{vae_latent_forward.1} parent=1 // pred_check_branch
      %13 = sbr.rel (0) target = $region9
    $region8: #{vae_latent_forward.1} parent=1 // pred_region
      %s15 = ssub.s32 32768, 32768
      %16 = vsyncadd [#allocation3], %s15
      %s17 = sshll.u32 [#allocation2], 4
      %s18 = int_to_ptr.vmem [resolvable:$true] %s17
      %23 = dma.hbm_to_vmem [thread:$0]  %s1, 32768, %s18, [#allocation3], 256, 256, 16
    $region9: #{vae_latent_forward.1} parent=1 // pred_fallthru
      _
    // Predicated region
    $region10: #{vae_latent_forward.1} parent=1 // pred_check
      _
    $region11: #{vae_latent_forward.1} parent=1 // pred_check_branch
      %25 = sbr.rel (0) target = $region13
    $region12: #{vae_latent_forward.1} parent=1 // pred_region
      _
    $region13: #{vae_latent_forward.1} parent=1 // pred_fallthru
      _
    // Predicated region
    $region14: #{vae_latent_forward.1} parent=1 // pred_check
      _
    $region15: #{vae_latent_forward.1} parent=1 // pred_check_branch
      %27 = sbr.rel (0) target = $region17
    $region16: #{vae_latent_forward.1} parent=1 // pred_region
      _
    $region17: #{vae_latent_forward.1} parent=1 // pred_fallthru
      _
    // Predicated region
    $region18: #{vae_latent_forward.1} parent=1 // pred_check
      _
    $region19: #{vae_latent_forward.1} parent=1 // pred_check_branch
      %29 = sbr.rel (0) target = $region21
    $region20: #{vae_latent_forward.1} parent=1 // pred_region
      %30 = dma.done [#allocation3], 32768
    $region21: #{vae_latent_forward.1} parent=1 // pred_fallthru
      _
    %v31 = vld [vmem:[%s0] sm:$0xff]
    %v32 = vld [vmem:[%s0 + $0x8] sm:$0xff]
    %v33 = vld [vmem:[#allocation2] sm:$0xff]
    %v34 = vld [vmem:[#allocation2 + $0x8] sm:$0xff]
    %v35 = vld [vmem:[#allocation2 + $0x10] sm:$0xff]
    %v36 = vld [vmem:[#allocation2 + $0x18] sm:$0xff]
    %v37 = vld [vmem:[#allocation2 + $0x20] sm:$0xff]
    %v38 = vld [vmem:[#allocation2 + $0x28] sm:$0xff]
    %v39 = vld [vmem:[#allocation2 + $0x30] sm:$0xff]
    %v40 = vld [vmem:[#allocation2 + $0x38] sm:$0xff]
    %v41 = vld [vmem:[#allocation2 + $0x40] sm:$0xff]
    %v42 = vld [vmem:[#allocation2 + $0x48] sm:$0xff]
    %v43 = vld [vmem:[#allocation2 + $0x50] sm:$0xff]
    %v44 = vld [vmem:[#allocation2 + $0x58] sm:$0xff]
    %v45 = vld [vmem:[#allocation2 + $0x60] sm:$0xff]
    %v46 = vld [vmem:[#allocation2 + $0x68] sm:$0xff]
    %v47 = vld [vmem:[#allocation2 + $0x70] sm:$0xff]
    %v48 = vld [vmem:[#allocation2 + $0x78] sm:$0xff]
    %v49 = vld [vmem:[#allocation2 + $0x80] sm:$0xff]
    %v50 = vld [vmem:[#allocation2 + $0x88] sm:$0xff]
    %v51 = vld [vmem:[#allocation2 + $0x90] sm:$0xff]
    %v52 = vld [vmem:[#allocation2 + $0x98] sm:$0xff]
    %v53 = vld [vmem:[#allocation2 + $0xa0] sm:$0xff]
    %v54 = vld [vmem:[#allocation2 + $0xa8] sm:$0xff]
    %v55 = vld [vmem:[#allocation2 + $0xb0] sm:$0xff]
    %v56 = vld [vmem:[#allocation2 + $0xb8] sm:$0xff]
    %v57 = vld [vmem:[#allocation2 + $0xc0] sm:$0xff]
    %v58 = vld [vmem:[#allocation2 + $0xc8] sm:$0xff]
    %v59 = vld [vmem:[#allocation2 + $0xd0] sm:$0xff]
    %v60 = vld [vmem:[#allocation2 + $0xd8] sm:$0xff]
    %v61 = vld [vmem:[#allocation2 + $0xe0] sm:$0xff]
    %v62 = vld [vmem:[#allocation2 + $0xe8] sm:$0xff]
    %v63 = vld [vmem:[#allocation2 + $0xf0] sm:$0xff]
    %v64 = vld [vmem:[#allocation2 + $0xf8] sm:$0xff]
    %v65 = vld [vmem:[#allocation2 + $0x100] sm:$0xff]
    %v66 = vld [vmem:[#allocation2 + $0x108] sm:$0xff]
    %v67 = vld [vmem:[#allocation2 + $0x110] sm:$0xff]
    %v68 = vld [vmem:[#allocation2 + $0x118] sm:$0xff]
    %v69 = vld [vmem:[#allocation2 + $0x120] sm:$0xff]
    %v70 = vld [vmem:[#allocation2 + $0x128] sm:$0xff]
    %v71 = vld [vmem:[#allocation2 + $0x130] sm:$0xff]
    %v72 = vld [vmem:[#allocation2 + $0x138] sm:$0xff]
    %v73 = vld [vmem:[#allocation2 + $0x140] sm:$0xff]
    %v74 = vld [vmem:[#allocation2 + $0x148] sm:$0xff]
    %v75 = vld [vmem:[#allocation2 + $0x150] sm:$0xff]
    %v76 = vld [vmem:[#allocation2 + $0x158] sm:$0xff]
    %v77 = vld [vmem:[#allocation2 + $0x160] sm:$0xff]
    %v78 = vld [vmem:[#allocation2 + $0x168] sm:$0xff]
    %v79 = vld [vmem:[#allocation2 + $0x170] sm:$0xff]
    %v80 = vld [vmem:[#allocation2 + $0x178] sm:$0xff]
    %v81 = vld [vmem:[#allocation2 + $0x180] sm:$0xff]
    %v82 = vld [vmem:[#allocation2 + $0x188] sm:$0xff]
    %v83 = vld [vmem:[#allocation2 + $0x190] sm:$0xff]
    %v84 = vld [vmem:[#allocation2 + $0x198] sm:$0xff]
    %v85 = vld [vmem:[#allocation2 + $0x1a0] sm:$0xff]
    %v86 = vld [vmem:[#allocation2 + $0x1a8] sm:$0xff]
    %v87 = vld [vmem:[#allocation2 + $0x1b0] sm:$0xff]
    %v88 = vld [vmem:[#allocation2 + $0x1b8] sm:$0xff]
    %v89 = vld [vmem:[#allocation2 + $0x1c0] sm:$0xff]
    %v90 = vld [vmem:[#allocation2 + $0x1c8] sm:$0xff]
    %v91 = vld [vmem:[#allocation2 + $0x1d0] sm:$0xff]
    %v92 = vld [vmem:[#allocation2 + $0x1d8] sm:$0xff]
    %v93 = vld [vmem:[#allocation2 + $0x1e0] sm:$0xff]
    %v94 = vld [vmem:[#allocation2 + $0x1e8] sm:$0xff]
    %v95 = vld [vmem:[#allocation2 + $0x1f0] sm:$0xff]
    %v96 = vld [vmem:[#allocation2 + $0x1f8] sm:$0xff]
    %v97 = vld [vmem:[#allocation2 + $0x200] sm:$0xff]
    %v98 = vld [vmem:[#allocation2 + $0x208] sm:$0xff]
    %v99 = vld [vmem:[#allocation2 + $0x210] sm:$0xff]
    %v100 = vld [vmem:[#allocation2 + $0x218] sm:$0xff]
    %v101 = vld [vmem:[#allocation2 + $0x220] sm:$0xff]
    %v102 = vld [vmem:[#allocation2 + $0x228] sm:$0xff]
    %v103 = vld [vmem:[#allocation2 + $0x230] sm:$0xff]
    %v104 = vld [vmem:[#allocation2 + $0x238] sm:$0xff]
    %v105 = vld [vmem:[#allocation2 + $0x240] sm:$0xff]
    %v106 = vld [vmem:[#allocation2 + $0x248] sm:$0xff]
    %v107 = vld [vmem:[#allocation2 + $0x250] sm:$0xff]
    %v108 = vld [vmem:[#allocation2 + $0x258] sm:$0xff]
    %v109 = vld [vmem:[#allocation2 + $0x260] sm:$0xff]
    %v110 = vld [vmem:[#allocation2 + $0x268] sm:$0xff]
    %v111 = vld [vmem:[#allocation2 + $0x270] sm:$0xff]
    %v112 = vld [vmem:[#allocation2 + $0x278] sm:$0xff]
    %v113 = vld [vmem:[#allocation2 + $0x280] sm:$0xff]
    %v114 = vld [vmem:[#allocation2 + $0x288] sm:$0xff]
    %v115 = vld [vmem:[#allocation2 + $0x290] sm:$0xff]
    %v116 = vld [vmem:[#allocation2 + $0x298] sm:$0xff]
    %v117 = vld [vmem:[#allocation2 + $0x2a0] sm:$0xff]
    %v118 = vld [vmem:[#allocation2 + $0x2a8] sm:$0xff]
    %v119 = vld [vmem:[#allocation2 + $0x2b0] sm:$0xff]
    %v120 = vld [vmem:[#allocation2 + $0x2b8] sm:$0xff]
    %v121 = vld [vmem:[#allocation2 + $0x2c0] sm:$0xff]
    %v122 = vld [vmem:[#allocation2 + $0x2c8] sm:$0xff]
    %v123 = vld [vmem:[#allocation2 + $0x2d0] sm:$0xff]
    %v124 = vld [vmem:[#allocation2 + $0x2d8] sm:$0xff]
    %v125 = vld [vmem:[#allocation2 + $0x2e0] sm:$0xff]
    %v126 = vld [vmem:[#allocation2 + $0x2e8] sm:$0xff]
    %v127 = vld [vmem:[#allocation2 + $0x2f0] sm:$0xff]
    %v128 = vld [vmem:[#allocation2 + $0x2f8] sm:$0xff]
    %v129 = vld [vmem:[#allocation2 + $0x300] sm:$0xff]
    %v130 = vld [vmem:[#allocation2 + $0x308] sm:$0xff]
    %v131 = vld [vmem:[#allocation2 + $0x310] sm:$0xff]
    %v132 = vld [vmem:[#allocation2 + $0x318] sm:$0xff]
    %v133 = vld [vmem:[#allocation2 + $0x320] sm:$0xff]
    %v134 = vld [vmem:[#allocation2 + $0x328] sm:$0xff]
    %v135 = vld [vmem:[#allocation2 + $0x330] sm:$0xff]
    %v136 = vld [vmem:[#allocation2 + $0x338] sm:$0xff]
    %v137 = vld [vmem:[#allocation2 + $0x340] sm:$0xff]
    %v138 = vld [vmem:[#allocation2 + $0x348] sm:$0xff]
    %v139 = vld [vmem:[#allocation2 + $0x350] sm:$0xff]
    %v140 = vld [vmem:[#allocation2 + $0x358] sm:$0xff]
    %v141 = vld [vmem:[#allocation2 + $0x360] sm:$0xff]
    %v142 = vld [vmem:[#allocation2 + $0x368] sm:$0xff]
    %v143 = vld [vmem:[#allocation2 + $0x370] sm:$0xff]
    %v144 = vld [vmem:[#allocation2 + $0x378] sm:$0xff]
    %v145 = vld [vmem:[#allocation2 + $0x380] sm:$0xff]
    %v146 = vld [vmem:[#allocation2 + $0x388] sm:$0xff]
    %v147 = vld [vmem:[#allocation2 + $0x390] sm:$0xff]
    %v148 = vld [vmem:[#allocation2 + $0x398] sm:$0xff]
    %v149 = vld [vmem:[#allocation2 + $0x3a0] sm:$0xff]
    %v150 = vld [vmem:[#allocation2 + $0x3a8] sm:$0xff]
    %v151 = vld [vmem:[#allocation2 + $0x3b0] sm:$0xff]
    %v152 = vld [vmem:[#allocation2 + $0x3b8] sm:$0xff]
    %v153 = vld [vmem:[#allocation2 + $0x3c0] sm:$0xff]
    %v154 = vld [vmem:[#allocation2 + $0x3c8] sm:$0xff]
    %v155 = vld [vmem:[#allocation2 + $0x3d0] sm:$0xff]
    %v156 = vld [vmem:[#allocation2 + $0x3d8] sm:$0xff]
    %v157 = vld [vmem:[#allocation2 + $0x3e0] sm:$0xff]
    %v158 = vld [vmem:[#allocation2 + $0x3e8] sm:$0xff]
    %v159 = vld [vmem:[#allocation2 + $0x3f0] sm:$0xff]
    %v160 = vld [vmem:[#allocation2 + $0x3f8] sm:$0xff]
    %v161 = vld [vmem:[#allocation2 + $0x400] sm:$0xff]
    %v162 = vld [vmem:[#allocation2 + $0x408] sm:$0xff]
    %v163 = vld [vmem:[#allocation2 + $0x410] sm:$0xff]
    %v164 = vld [vmem:[#allocation2 + $0x418] sm:$0xff]
    %v165 = vld [vmem:[#allocation2 + $0x420] sm:$0xff]
    %v166 = vld [vmem:[#allocation2 + $0x428] sm:$0xff]
    %v167 = vld [vmem:[#allocation2 + $0x430] sm:$0xff]
    %v168 = vld [vmem:[#allocation2 + $0x438] sm:$0xff]
    %v169 = vld [vmem:[#allocation2 + $0x440] sm:$0xff]
    %v170 = vld [vmem:[#allocation2 + $0x448] sm:$0xff]
    %v171 = vld [vmem:[#allocation2 + $0x450] sm:$0xff]
    %v172 = vld [vmem:[#allocation2 + $0x458] sm:$0xff]
    %v173 = vld [vmem:[#allocation2 + $0x460] sm:$0xff]
    %v174 = vld [vmem:[#allocation2 + $0x468] sm:$0xff]
    %v175 = vld [vmem:[#allocation2 + $0x470] sm:$0xff]
    %v176 = vld [vmem:[#allocation2 + $0x478] sm:$0xff]
    %v177 = vld [vmem:[#allocation2 + $0x480] sm:$0xff]
    %v178 = vld [vmem:[#allocation2 + $0x488] sm:$0xff]
    %v179 = vld [vmem:[#allocation2 + $0x490] sm:$0xff]
    %v180 = vld [vmem:[#allocation2 + $0x498] sm:$0xff]
    %v181 = vld [vmem:[#allocation2 + $0x4a0] sm:$0xff]
    %v182 = vld [vmem:[#allocation2 + $0x4a8] sm:$0xff]
    %v183 = vld [vmem:[#allocation2 + $0x4b0] sm:$0xff]
    %v184 = vld [vmem:[#allocation2 + $0x4b8] sm:$0xff]
    %v185 = vld [vmem:[#allocation2 + $0x4c0] sm:$0xff]
    %v186 = vld [vmem:[#allocation2 + $0x4c8] sm:$0xff]
    %v187 = vld [vmem:[#allocation2 + $0x4d0] sm:$0xff]
    %v188 = vld [vmem:[#allocation2 + $0x4d8] sm:$0xff]
    %v189 = vld [vmem:[#allocation2 + $0x4e0] sm:$0xff]
    %v190 = vld [vmem:[#allocation2 + $0x4e8] sm:$0xff]
    %v191 = vld [vmem:[#allocation2 + $0x4f0] sm:$0xff]
    %v192 = vld [vmem:[#allocation2 + $0x4f8] sm:$0xff]
    %v193 = vld [vmem:[#allocation2 + $0x500] sm:$0xff]
    %v194 = vld [vmem:[#allocation2 + $0x508] sm:$0xff]
    %v195 = vld [vmem:[#allocation2 + $0x510] sm:$0xff]
    %v196 = vld [vmem:[#allocation2 + $0x518] sm:$0xff]
    %v197 = vld [vmem:[#allocation2 + $0x520] sm:$0xff]
    %v198 = vld [vmem:[#allocation2 + $0x528] sm:$0xff]
    %v199 = vld [vmem:[#allocation2 + $0x530] sm:$0xff]
    %v200 = vld [vmem:[#allocation2 + $0x538] sm:$0xff]
    %v201 = vld [vmem:[#allocation2 + $0x540] sm:$0xff]
    %v202 = vld [vmem:[#allocation2 + $0x548] sm:$0xff]
    %v203 = vld [vmem:[#allocation2 + $0x550] sm:$0xff]
    %v204 = vld [vmem:[#allocation2 + $0x558] sm:$0xff]
    %v205 = vld [vmem:[#allocation2 + $0x560] sm:$0xff]
    %v206 = vld [vmem:[#allocation2 + $0x568] sm:$0xff]
    %v207 = vld [vmem:[#allocation2 + $0x570] sm:$0xff]
    %v208 = vld [vmem:[#allocation2 + $0x578] sm:$0xff]
    %v209 = vld [vmem:[#allocation2 + $0x580] sm:$0xff]
    %v210 = vld [vmem:[#allocation2 + $0x588] sm:$0xff]
    %v211 = vld [vmem:[#allocation2 + $0x590] sm:$0xff]
    %v212 = vld [vmem:[#allocation2 + $0x598] sm:$0xff]
    %v213 = vld [vmem:[#allocation2 + $0x5a0] sm:$0xff]
    %v214 = vld [vmem:[#allocation2 + $0x5a8] sm:$0xff]
    %v215 = vld [vmem:[#allocation2 + $0x5b0] sm:$0xff]
    %v216 = vld [vmem:[#allocation2 + $0x5b8] sm:$0xff]
    %v217 = vld [vmem:[#allocation2 + $0x5c0] sm:$0xff]
    %v218 = vld [vmem:[#allocation2 + $0x5c8] sm:$0xff]
    %v219 = vld [vmem:[#allocation2 + $0x5d0] sm:$0xff]
    %v220 = vld [vmem:[#allocation2 + $0x5d8] sm:$0xff]
    %v221 = vld [vmem:[#allocation2 + $0x5e0] sm:$0xff]
    %v222 = vld [vmem:[#allocation2 + $0x5e8] sm:$0xff]
    %v223 = vld [vmem:[#allocation2 + $0x5f0] sm:$0xff]
    %v224 = vld [vmem:[#allocation2 + $0x5f8] sm:$0xff]
    %v225 = vld [vmem:[#allocation2 + $0x600] sm:$0xff]
    %v226 = vld [vmem:[#allocation2 + $0x608] sm:$0xff]
    %v227 = vld [vmem:[#allocation2 + $0x610] sm:$0xff]
    %v228 = vld [vmem:[#allocation2 + $0x618] sm:$0xff]
    %v229 = vld [vmem:[#allocation2 + $0x620] sm:$0xff]
    %v230 = vld [vmem:[#allocation2 + $0x628] sm:$0xff]
    %v231 = vld [vmem:[#allocation2 + $0x630] sm:$0xff]
    %v232 = vld [vmem:[#allocation2 + $0x638] sm:$0xff]
    %v233 = vld [vmem:[#allocation2 + $0x640] sm:$0xff]
    %v234 = vld [vmem:[#allocation2 + $0x648] sm:$0xff]
    %v235 = vld [vmem:[#allocation2 + $0x650] sm:$0xff]
    %v236 = vld [vmem:[#allocation2 + $0x658] sm:$0xff]
    %v237 = vld [vmem:[#allocation2 + $0x660] sm:$0xff]
    %v238 = vld [vmem:[#allocation2 + $0x668] sm:$0xff]
    %v239 = vld [vmem:[#allocation2 + $0x670] sm:$0xff]
    %v240 = vld [vmem:[#allocation2 + $0x678] sm:$0xff]
    %v241 = vld [vmem:[#allocation2 + $0x680] sm:$0xff]
    %v242 = vld [vmem:[#allocation2 + $0x688] sm:$0xff]
    %v243 = vld [vmem:[#allocation2 + $0x690] sm:$0xff]
    %v244 = vld [vmem:[#allocation2 + $0x698] sm:$0xff]
    %v245 = vld [vmem:[#allocation2 + $0x6a0] sm:$0xff]
    %v246 = vld [vmem:[#allocation2 + $0x6a8] sm:$0xff]
    %v247 = vld [vmem:[#allocation2 + $0x6b0] sm:$0xff]
    %v248 = vld [vmem:[#allocation2 + $0x6b8] sm:$0xff]
    %v249 = vld [vmem:[#allocation2 + $0x6c0] sm:$0xff]
    %v250 = vld [vmem:[#allocation2 + $0x6c8] sm:$0xff]
    %v251 = vld [vmem:[#allocation2 + $0x6d0] sm:$0xff]
    %v252 = vld [vmem:[#allocation2 + $0x6d8] sm:$0xff]
    %v253 = vld [vmem:[#allocation2 + $0x6e0] sm:$0xff]
    %v254 = vld [vmem:[#allocation2 + $0x6e8] sm:$0xff]
    %v255 = vld [vmem:[#allocation2 + $0x6f0] sm:$0xff]
    %v256 = vld [vmem:[#allocation2 + $0x6f8] sm:$0xff]
    %v257 = vld [vmem:[#allocation2 + $0x700] sm:$0xff]
    %v258 = vld [vmem:[#allocation2 + $0x708] sm:$0xff]
    %v259 = vld [vmem:[#allocation2 + $0x710] sm:$0xff]
    %v260 = vld [vmem:[#allocation2 + $0x718] sm:$0xff]
    %v261 = vld [vmem:[#allocation2 + $0x720] sm:$0xff]
    %v262 = vld [vmem:[#allocation2 + $0x728] sm:$0xff]
    %v263 = vld [vmem:[#allocation2 + $0x730] sm:$0xff]
    %v264 = vld [vmem:[#allocation2 + $0x738] sm:$0xff]
    %v265 = vld [vmem:[#allocation2 + $0x740] sm:$0xff]
    %v266 = vld [vmem:[#allocation2 + $0x748] sm:$0xff]
    %v267 = vld [vmem:[#allocation2 + $0x750] sm:$0xff]
    %v268 = vld [vmem:[#allocation2 + $0x758] sm:$0xff]
    %v269 = vld [vmem:[#allocation2 + $0x760] sm:$0xff]
    %v270 = vld [vmem:[#allocation2 + $0x768] sm:$0xff]
    %v271 = vld [vmem:[#allocation2 + $0x770] sm:$0xff]
    %v272 = vld [vmem:[#allocation2 + $0x778] sm:$0xff]
    %v273 = vld [vmem:[#allocation2 + $0x780] sm:$0xff]
    %v274 = vld [vmem:[#allocation2 + $0x788] sm:$0xff]
    %v275 = vld [vmem:[#allocation2 + $0x790] sm:$0xff]
    %v276 = vld [vmem:[#allocation2 + $0x798] sm:$0xff]
    %v277 = vld [vmem:[#allocation2 + $0x7a0] sm:$0xff]
    %v278 = vld [vmem:[#allocation2 + $0x7a8] sm:$0xff]
    %v279 = vld [vmem:[#allocation2 + $0x7b0] sm:$0xff]
    %v280 = vld [vmem:[#allocation2 + $0x7b8] sm:$0xff]
    %v281 = vld [vmem:[#allocation2 + $0x7c0] sm:$0xff]
    %v282 = vld [vmem:[#allocation2 + $0x7c8] sm:$0xff]
    %v283 = vld [vmem:[#allocation2 + $0x7d0] sm:$0xff]
    %v284 = vld [vmem:[#allocation2 + $0x7d8] sm:$0xff]
    %v285 = vld [vmem:[#allocation2 + $0x7e0] sm:$0xff]
    %v286 = vld [vmem:[#allocation2 + $0x7e8] sm:$0xff]
    %v287 = vld [vmem:[#allocation2 + $0x7f0] sm:$0xff]
    %v288 = vld [vmem:[#allocation2 + $0x7f8] sm:$0xff]
    %v289 = vld [vmem:[%s2] sm:$0x3]
    %v291 = vlaneseq
    %v292 = vshrl.u32 %v291, 7
    %v293 = vsub.s32 0, %v292
    %v294 = vrot.slane %v289, %v293
    %v295 = vlaneseq
    %v296 = vshrl.u32 %v295, 7
    %v297 = vsub.s32 1, %v296
    %v298 = vrot.slane %v289, %v297
    %v303 = vcombine.high %v31, %v31
    %v305 = vunpack.c.l.s4 1983009808
    %v306 = vunpack.c.0.s8 %v305
    %v307 = vlaneseq
    %v308 = vshrl.u32 %v307, 7
    %v309 = vsub.s32 %v306, %v308
    %v310 = vrot.slane %v31, %v309
    %v312 = vunpack.c.l.s4 1983009808
    %v313 = vunpack.c.0.s8 %v312
    %v314 = vlaneseq
    %v315 = vshrl.u32 %v314, 7
    %v316 = vsub.s32 %v313, %v315
    %v317 = vrot.slane %v303, %v316
    %v318 = vcombine.high %v310, %v310
    %v319 = vcombine.high %v317, %v317
    %v320 = vcombine.high %v32, %v32
    %v322 = vunpack.c.l.s4 1983009808
    %v323 = vunpack.c.0.s8 %v322
    %v324 = vlaneseq
    %v325 = vshrl.u32 %v324, 7
    %v326 = vsub.s32 %v323, %v325
    %v327 = vrot.slane %v32, %v326
    %v329 = vunpack.c.l.s4 1983009808
    %v330 = vunpack.c.0.s8 %v329
    %v331 = vlaneseq
    %v332 = vshrl.u32 %v331, 7
    %v333 = vsub.s32 %v330, %v332
    %v334 = vrot.slane %v320, %v333
    %v335 = vcombine.high %v327, %v327
    %v336 = vcombine.high %v334, %v334
    %345 = vmatprep.subr.mxu0 %v34
    %346 = vmatpush1.msra.mxu0 %v33
    %347 = vmatprep.subr.mxu0 %v36
    %348 = vmatpush1.msra.mxu0 %v35
    %349 = vmatprep.subr.mxu0 %v38
    %350 = vmatpush1.msra.mxu0 %v37
    %351 = vmatprep.subr.mxu0 %v40
    %352 = vmatpush1.msra.mxu0 %v39
    %353 = vmatprep.subr.mxu0 %v42
    %354 = vmatpush1.msra.mxu0 %v41
    %355 = vmatprep.subr.mxu0 %v44
    %356 = vmatpush1.msra.mxu0 %v43
    %357 = vmatprep.subr.mxu0 %v46
    %358 = vmatpush1.msra.mxu0 %v45
    %359 = vmatprep.subr.mxu0 %v48
    %360 = vmatpush1.msra.mxu0 %v47
    %361 = vmatprep.subr.mxu0 %v50
    %362 = vmatpush1.msra.mxu0 %v49
    %363 = vmatprep.subr.mxu0 %v52
    %364 = vmatpush1.msra.mxu0 %v51
    %365 = vmatprep.subr.mxu0 %v54
    %366 = vmatpush1.msra.mxu0 %v53
    %367 = vmatprep.subr.mxu0 %v56
    %368 = vmatpush1.msra.mxu0 %v55
    %369 = vmatprep.subr.mxu0 %v58
    %370 = vmatpush1.msra.mxu0 %v57
    %371 = vmatprep.subr.mxu0 %v60
    %372 = vmatpush1.msra.mxu0 %v59
    %373 = vmatprep.subr.mxu0 %v62
    %374 = vmatpush1.msra.mxu0 %v61
    %375 = vmatprep.subr.mxu0 %v64
    %376 = vmatpush1.msra.mxu0 %v63
    %377 = vmatprep.subr.mxu0 %v66
    %378 = vmatpush1.msra.mxu0 %v65
    %379 = vmatprep.subr.mxu0 %v68
    %380 = vmatpush1.msra.mxu0 %v67
    %381 = vmatprep.subr.mxu0 %v70
    %382 = vmatpush1.msra.mxu0 %v69
    %383 = vmatprep.subr.mxu0 %v72
    %384 = vmatpush1.msra.mxu0 %v71
    %385 = vmatprep.subr.mxu0 %v74
    %386 = vmatpush1.msra.mxu0 %v73
    %387 = vmatprep.subr.mxu0 %v76
    %388 = vmatpush1.msra.mxu0 %v75
    %389 = vmatprep.subr.mxu0 %v78
    %390 = vmatpush1.msra.mxu0 %v77
    %391 = vmatprep.subr.mxu0 %v80
    %392 = vmatpush1.msra.mxu0 %v79
    %393 = vmatprep.subr.mxu0 %v82
    %394 = vmatpush1.msra.mxu0 %v81
    %395 = vmatprep.subr.mxu0 %v84
    %396 = vmatpush1.msra.mxu0 %v83
    %397 = vmatprep.subr.mxu0 %v86
    %398 = vmatpush1.msra.mxu0 %v85
    %399 = vmatprep.subr.mxu0 %v88
    %400 = vmatpush1.msra.mxu0 %v87
    %401 = vmatprep.subr.mxu0 %v90
    %402 = vmatpush1.msra.mxu0 %v89
    %403 = vmatprep.subr.mxu0 %v92
    %404 = vmatpush1.msra.mxu0 %v91
    %405 = vmatprep.subr.mxu0 %v94
    %406 = vmatpush1.msra.mxu0 %v93
    %407 = vmatprep.subr.mxu0 %v96
    %408 = vmatpush1.msra.mxu0 %v95
    %409 = vmatprep.mubr.f32.mxu0 %v318
    %410 = vmatmul.mubr.f32.gmra.mrb[0].mxu0 %v310
    %v411 = vpop.f32.mrb[0].mxu0
    %v412 = vadd.f32 %v294, %v411
    %v413 = vpop.f32.mrb[0].mxu0
    %v414 = vadd.f32 %v298, %v413
    %415 = vdwg.mxu0
    %416 = vmatprep.subr.mxu0 %v98
    %417 = vmatpush1.msra.mxu0 %v97
    %418 = vmatprep.subr.mxu0 %v100
    %419 = vmatpush1.msra.mxu0 %v99
    %420 = vmatprep.subr.mxu0 %v102
    %421 = vmatpush1.msra.mxu0 %v101
    %422 = vmatprep.subr.mxu0 %v104
    %423 = vmatpush1.msra.mxu0 %v103
    %424 = vmatprep.subr.mxu0 %v106
    %425 = vmatpush1.msra.mxu0 %v105
    %426 = vmatprep.subr.mxu0 %v108
    %427 = vmatpush1.msra.mxu0 %v107
    %428 = vmatprep.subr.mxu0 %v110
    %429 = vmatpush1.msra.mxu0 %v109
    %430 = vmatprep.subr.mxu0 %v112
    %431 = vmatpush1.msra.mxu0 %v111
    %432 = vmatprep.subr.mxu0 %v114
    %433 = vmatpush1.msra.mxu0 %v113
    %434 = vmatprep.subr.mxu0 %v116
    %435 = vmatpush1.msra.mxu0 %v115
    %436 = vmatprep.subr.mxu0 %v118
    %437 = vmatpush1.msra.mxu0 %v117
    %438 = vmatprep.subr.mxu0 %v120
    %439 = vmatpush1.msra.mxu0 %v119
    %440 = vmatprep.subr.mxu0 %v122
    %441 = vmatpush1.msra.mxu0 %v121
    %442 = vmatprep.subr.mxu0 %v124
    %443 = vmatpush1.msra.mxu0 %v123
    %444 = vmatprep.subr.mxu0 %v126
    %445 = vmatpush1.msra.mxu0 %v125
    %446 = vmatprep.subr.mxu0 %v128
    %447 = vmatpush1.msra.mxu0 %v127
    %448 = vmatprep.subr.mxu0 %v130
    %449 = vmatpush1.msra.mxu0 %v129
    %450 = vmatprep.subr.mxu0 %v132
    %451 = vmatpush1.msra.mxu0 %v131
    %452 = vmatprep.subr.mxu0 %v134
    %453 = vmatpush1.msra.mxu0 %v133
    %454 = vmatprep.subr.mxu0 %v136
    %455 = vmatpush1.msra.mxu0 %v135
    %456 = vmatprep.subr.mxu0 %v138
    %457 = vmatpush1.msra.mxu0 %v137
    %458 = vmatprep.subr.mxu0 %v140
    %459 = vmatpush1.msra.mxu0 %v139
    %460 = vmatprep.subr.mxu0 %v142
    %461 = vmatpush1.msra.mxu0 %v141
    %462 = vmatprep.subr.mxu0 %v144
    %463 = vmatpush1.msra.mxu0 %v143
    %464 = vmatprep.subr.mxu0 %v146
    %465 = vmatpush1.msra.mxu0 %v145
    %466 = vmatprep.subr.mxu0 %v148
    %467 = vmatpush1.msra.mxu0 %v147
    %468 = vmatprep.subr.mxu0 %v150
    %469 = vmatpush1.msra.mxu0 %v149
    %470 = vmatprep.subr.mxu0 %v152
    %471 = vmatpush1.msra.mxu0 %v151
    %472 = vmatprep.subr.mxu0 %v154
    %473 = vmatpush1.msra.mxu0 %v153
    %474 = vmatprep.subr.mxu0 %v156
    %475 = vmatpush1.msra.mxu0 %v155
    %476 = vmatprep.subr.mxu0 %v158
    %477 = vmatpush1.msra.mxu0 %v157
    %478 = vmatprep.subr.mxu0 %v160
    %479 = vmatpush1.msra.mxu0 %v159
    %480 = vmatprep.mubr.f32.mxu0 %v319
    %481 = vmatmul.mubr.f32.gmra.mrb[0].mxu0 %v317
    %v482 = vpop.f32.mrb[0].mxu0
    %v483 = vadd.f32 %v412, %v482
    %v484 = vpop.f32.mrb[0].mxu0
    %v485 = vadd.f32 %v414, %v484
    %486 = vdwg.mxu0
    %487 = vmatprep.subr.mxu0 %v162
    %488 = vmatpush1.msra.mxu0 %v161
    %489 = vmatprep.subr.mxu0 %v164
    %490 = vmatpush1.msra.mxu0 %v163
    %491 = vmatprep.subr.mxu0 %v166
    %492 = vmatpush1.msra.mxu0 %v165
    %493 = vmatprep.subr.mxu0 %v168
    %494 = vmatpush1.msra.mxu0 %v167
    %495 = vmatprep.subr.mxu0 %v170
    %496 = vmatpush1.msra.mxu0 %v169
    %497 = vmatprep.subr.mxu0 %v172
    %498 = vmatpush1.msra.mxu0 %v171
    %499 = vmatprep.subr.mxu0 %v174
    %500 = vmatpush1.msra.mxu0 %v173
    %501 = vmatprep.subr.mxu0 %v176
    %502 = vmatpush1.msra.mxu0 %v175
    %503 = vmatprep.subr.mxu0 %v178
    %504 = vmatpush1.msra.mxu0 %v177
    %505 = vmatprep.subr.mxu0 %v180
    %506 = vmatpush1.msra.mxu0 %v179
    %507 = vmatprep.subr.mxu0 %v182
    %508 = vmatpush1.msra.mxu0 %v181
    %509 = vmatprep.subr.mxu0 %v184
    %510 = vmatpush1.msra.mxu0 %v183
    %511 = vmatprep.subr.mxu0 %v186
    %512 = vmatpush1.msra.mxu0 %v185
    %513 = vmatprep.subr.mxu0 %v188
    %514 = vmatpush1.msra.mxu0 %v187
    %515 = vmatprep.subr.mxu0 %v190
    %516 = vmatpush1.msra.mxu0 %v189
    %517 = vmatprep.subr.mxu0 %v192
    %518 = vmatpush1.msra.mxu0 %v191
    %519 = vmatprep.subr.mxu0 %v194
    %520 = vmatpush1.msra.mxu0 %v193
    %521 = vmatprep.subr.mxu0 %v196
    %522 = vmatpush1.msra.mxu0 %v195
    %523 = vmatprep.subr.mxu0 %v198
    %524 = vmatpush1.msra.mxu0 %v197
    %525 = vmatprep.subr.mxu0 %v200
    %526 = vmatpush1.msra.mxu0 %v199
    %527 = vmatprep.subr.mxu0 %v202
    %528 = vmatpush1.msra.mxu0 %v201
    %529 = vmatprep.subr.mxu0 %v204
    %530 = vmatpush1.msra.mxu0 %v203
    %531 = vmatprep.subr.mxu0 %v206
    %532 = vmatpush1.msra.mxu0 %v205
    %533 = vmatprep.subr.mxu0 %v208
    %534 = vmatpush1.msra.mxu0 %v207
    %535 = vmatprep.subr.mxu0 %v210
    %536 = vmatpush1.msra.mxu0 %v209
    %537 = vmatprep.subr.mxu0 %v212
    %538 = vmatpush1.msra.mxu0 %v211
    %539 = vmatprep.subr.mxu0 %v214
    %540 = vmatpush1.msra.mxu0 %v213
    %541 = vmatprep.subr.mxu0 %v216
    %542 = vmatpush1.msra.mxu0 %v215
    %543 = vmatprep.subr.mxu0 %v218
    %544 = vmatpush1.msra.mxu0 %v217
    %545 = vmatprep.subr.mxu0 %v220
    %546 = vmatpush1.msra.mxu0 %v219
    %547 = vmatprep.subr.mxu0 %v222
    %548 = vmatpush1.msra.mxu0 %v221
    %549 = vmatprep.subr.mxu0 %v224
    %550 = vmatpush1.msra.mxu0 %v223
    %551 = vmatprep.mubr.f32.mxu0 %v335
    %552 = vmatmul.mubr.f32.gmra.mrb[0].mxu0 %v327
    %v553 = vpop.f32.mrb[0].mxu0
    %v554 = vadd.f32 %v483, %v553
    %v555 = vpop.f32.mrb[0].mxu0
    %v556 = vadd.f32 %v485, %v555
    %557 = vdwg.mxu0
    %558 = vmatprep.subr.mxu0 %v226
    %559 = vmatpush1.msra.mxu0 %v225
    %560 = vmatprep.subr.mxu0 %v228
    %561 = vmatpush1.msra.mxu0 %v227
    %562 = vmatprep.subr.mxu0 %v230
    %563 = vmatpush1.msra.mxu0 %v229
    %564 = vmatprep.subr.mxu0 %v232
    %565 = vmatpush1.msra.mxu0 %v231
    %566 = vmatprep.subr.mxu0 %v234
    %567 = vmatpush1.msra.mxu0 %v233
    %568 = vmatprep.subr.mxu0 %v236
    %569 = vmatpush1.msra.mxu0 %v235
    %570 = vmatprep.subr.mxu0 %v238
    %571 = vmatpush1.msra.mxu0 %v237
    %572 = vmatprep.subr.mxu0 %v240
    %573 = vmatpush1.msra.mxu0 %v239
    %574 = vmatprep.subr.mxu0 %v242
    %575 = vmatpush1.msra.mxu0 %v241
    %576 = vmatprep.subr.mxu0 %v244
    %577 = vmatpush1.msra.mxu0 %v243
    %578 = vmatprep.subr.mxu0 %v246
    %579 = vmatpush1.msra.mxu0 %v245
    %580 = vmatprep.subr.mxu0 %v248
    %581 = vmatpush1.msra.mxu0 %v247
    %582 = vmatprep.subr.mxu0 %v250
    %583 = vmatpush1.msra.mxu0 %v249
    %584 = vmatprep.subr.mxu0 %v252
    %585 = vmatpush1.msra.mxu0 %v251
    %586 = vmatprep.subr.mxu0 %v254
    %587 = vmatpush1.msra.mxu0 %v253
    %588 = vmatprep.subr.mxu0 %v256
    %589 = vmatpush1.msra.mxu0 %v255
    %590 = vmatprep.subr.mxu0 %v258
    %591 = vmatpush1.msra.mxu0 %v257
    %592 = vmatprep.subr.mxu0 %v260
    %593 = vmatpush1.msra.mxu0 %v259
    %594 = vmatprep.subr.mxu0 %v262
    %595 = vmatpush1.msra.mxu0 %v261
    %596 = vmatprep.subr.mxu0 %v264
    %597 = vmatpush1.msra.mxu0 %v263
    %598 = vmatprep.subr.mxu0 %v266
    %599 = vmatpush1.msra.mxu0 %v265
    %600 = vmatprep.subr.mxu0 %v268
    %601 = vmatpush1.msra.mxu0 %v267
    %602 = vmatprep.subr.mxu0 %v270
    %603 = vmatpush1.msra.mxu0 %v269
    %604 = vmatprep.subr.mxu0 %v272
    %605 = vmatpush1.msra.mxu0 %v271
    %606 = vmatprep.subr.mxu0 %v274
    %607 = vmatpush1.msra.mxu0 %v273
    %608 = vmatprep.subr.mxu0 %v276
    %609 = vmatpush1.msra.mxu0 %v275
    %610 = vmatprep.subr.mxu0 %v278
    %611 = vmatpush1.msra.mxu0 %v277
    %612 = vmatprep.subr.mxu0 %v280
    %613 = vmatpush1.msra.mxu0 %v279
    %614 = vmatprep.subr.mxu0 %v282
    %615 = vmatpush1.msra.mxu0 %v281
    %616 = vmatprep.subr.mxu0 %v284
    %617 = vmatpush1.msra.mxu0 %v283
    %618 = vmatprep.subr.mxu0 %v286
    %619 = vmatpush1.msra.mxu0 %v285
    %620 = vmatprep.subr.mxu0 %v288
    %621 = vmatpush1.msra.mxu0 %v287
    %622 = vmatprep.mubr.f32.mxu0 %v336
    %623 = vmatmul.mubr.f32.gmra.mrb[0].mxu0 %v334
    %v624 = vpop.f32.mrb[0].mxu0
    %v625 = vadd.f32 %v554, %v624
    %v626 = vpop.f32.mrb[0].mxu0
    %v627 = vadd.f32 %v556, %v626
    %628 = vdwg.mxu0
    %vm629 = vcmp.gt.f32.partialorder %v627, 20.0
    %v630 = vmin.f32 %v627, 20.0
    %v631 = vmul.f32 %v630, 1.442695
    %v632 = vpow.pop %v631
    %v633 = vadd.f32 %v632, 1.0
    %v634 = vlog2.pop %v633
    %v635 = vmul.f32 %v634, 0.6931472
    %v636 = vmul.f32 -0.5, %v632
    %v637 = vadd.f32 %v636, 1.0
    %v638 = vmul.f32 %v637, %v632
    %v639 = vand.u32 2147483647, %v632
    %vm640 = vcmp.lt.f32.partialorder %v639, 0.0004427343
    %v641 = vsel %vm640, %v638, %v635
    %v642 = vsel %vm629, %v627, %v641
    %v643 = vmul.f32 %v627, 0.5
    %v644 = vmul.f32 %v643, 1.442695
    %v645 = vpow.pop %v644
    %v646 = vadd.f32 %v632, 1.0
    %v647 = vrsqrt.pop %v646
    %v648 = vmul.f32 %v646, %v647
    %vm649 = vcmp.eq.f32.partialorder %v646, inf
    %v650 = vsel %vm649, %v646, %v648
    %vm651 = vcmp.eq.f32.partialorder %v646, 0.0
    %v652 = vand.u32 %v646, 2147483648
    %v653 = vsel %vm651, %v652, %v650
    %v654 = vsel %vm629, %v645, %v653
    %v655 = vld [vmem:[%s3] sm:$0x3]
    %v656 = vmul.f32 %v655, %v654
    %v657 = vadd.f32 %v656, %v625
    %658 = vst [vmem:[%s4] sm:$0x3] %v657
    %659 = vst [vmem:[%s4 + $0x2] sm:$0x3] %v625
    %660 = vst [vmem:[%s4 + $0x4] sm:$0x3] %v642
    // Predicated region
    $region22: #{vae_latent_forward.1} parent=1 // pred_check
      _
    $region23: #{vae_latent_forward.1} parent=1 // pred_check_branch
      %662 = sbr.rel (0) target = $region25
    $region24: #{vae_latent_forward.1} parent=1 // pred_region
      _
    $region25: #{vae_latent_forward.1} parent=1 // pred_fallthru
      _
    // Predicated region
    $region26: #{vae_latent_forward.1} parent=1 // pred_check
      _
    $region27: #{vae_latent_forward.1} parent=1 // pred_check_branch
      %664 = sbr.rel (0) target = $region29
    $region28: #{vae_latent_forward.1} parent=1 // pred_region
      _
    $region29: #{vae_latent_forward.1} parent=1 // pred_fallthru
      _
    %665 = vsyncpa [#allocation3], 1

</llo_original>
